<compile_context>
chip_gen: v6e
topology: v6e:2x2x1
jax: 0.10.0
libtpu: 0.0.40
codegen_flags: <defaults>
</compile_context>

<pallas_src>
import functools

import jax
import jax.numpy as jnp
import numpy as np
from jax.experimental import pallas as pl
from jax.experimental.pallas import tpu as pltpu

_HALF_PI = 1.5707963267948966

# fdlibm-style minimax coefficients, accurate to f32 on [-pi/4, pi/4].
# sin(t) ~= t * (1 + t^2*(S1 + t^2*(S2 + t^2*(S3 + t^2*S4))))
_S1 = -0.166666666416265235595
_S2 = 0.0083333293858894631756
_S3 = -0.000198393348360966317347
_S4 = 0.0000027183114939898219064
# cos(t) ~= 1 + t^2*(C0 + t^2*(C1 + t^2*(C2 + t^2*C3)))
_C0 = -0.499999997251031003120
_C1 = 0.0416666233237390631894
_C2 = -0.00138867637746099294692
_C3 = 0.0000243904487962774090654


def _round_up(a: int, m: int) -> int:
    return -(-a // m) * m


def _gfp_kernel(x_ref, w4_ref, o_ref, *, half_dim: int):
    """x_ref: (TB, 1) f32, w4_ref: (1, H) f32 holding 4*W, o_ref: (TB, 2H)."""
    # Angle in quarter-periods: u = 4*x*W, so angle = (pi/2) * u = 2*pi*x*W.
    u = x_ref[...] * w4_ref[...]                      # (TB, H) broadcast outer product

    # --- shared range reduction (done ONCE for both sin and cos) ----------
    k = jnp.floor(u + 0.5)                            # nearest quarter-period
    theta = (u - k) * _HALF_PI                        # reduced angle in (-pi/4, pi/4]
    z = theta * theta

    # --- sin/cos polynomials sharing theta, z ------------------------------
    s = theta * (1.0 + z * (_S1 + z * (_S2 + z * (_S3 + z * _S4))))
    c = 1.0 + z * (_C0 + z * (_C1 + z * (_C2 + z * _C3)))

    # --- quadrant fix-up ----------------------------------------------------
    # angle = theta + (pi/2)*k ; q = k mod 4 (two's-complement AND handles k<0).
    q = k.astype(jnp.int32) & 3
    swap = (q & 1) == 1
    sin_v = jnp.where(swap, c, s)
    cos_v = jnp.where(swap, s, c)
    sin_v = jnp.where(q >= 2, -sin_v, sin_v)                 # q in {2,3}: negate sin
    cos_v = jnp.where((q == 1) | (q == 2), -cos_v, cos_v)    # q in {1,2}: negate cos

    # torch.cat([sin, cos], dim=-1)
    if half_dim % 128 == 0:
        # Both half-stores are lane-dense.
        o_ref[:, :half_dim] = sin_v.astype(o_ref.dtype)
        o_ref[:, half_dim:] = cos_v.astype(o_ref.dtype)
    else:
        # Avoid a masked partial store starting at a non-128-aligned column.
        o_ref[...] = jnp.concatenate([sin_v, cos_v], axis=-1).astype(o_ref.dtype)


def gaussian_fourier_projection(
    x: jax.Array,
    W: jax.Array,
    *,
    block_b: int = 1024,
    out_dtype=jnp.float32,
) -> jax.Array:
    """x: (B,) float, W: (embed_dim//2,) float -> (B, embed_dim) out_dtype.

    Pass out_dtype=jnp.bfloat16 when the consumer is bf16 (fast path on
    HBM-limited v5e: halves the output writeback).
    """
    B = x.shape[0]
    H = W.shape[0]
    embed_dim = 2 * H

    out_bytes = jnp.dtype(out_dtype).itemsize
    # Sublane packing of the *output* dtype: 8 rows (f32), 16 (bf16), 32 (8-bit).
    align = max(8, 32 // out_bytes)

    # VMEM budget for the batch tile: double-buffered output block plus a
    # conservative allowance for f32 intermediates (u, theta, z, s, c, q, ...).
    # Keeps us inside the 32 MiB scoped default on v5e/v6e/v7x without having
    # to raise vmem_limit_bytes.
    vmem_budget = 16 * 1024 * 1024
    per_row_bytes = 2 * embed_dim * out_bytes + 12 * H * 4
    tb_cap = max(align, (vmem_budget // per_row_bytes) // align * align)

    tb = min(block_b, tb_cap)
    tb = max(align, (tb // align) * align)
    # Never use a block taller than the (aligned) batch.
    tb = min(tb, _round_up(B, align))
    # v7x has 2 TensorCores: if one tile would cover all of B but B is big
    # enough to split, halve the tile so "parallel" has >= 2 tiles to shard.
    if pl.cdiv(B, tb) < 2 and B >= 2 * align:
        tb = max(align, _round_up(pl.cdiv(B, 2), align))

    grid_b = pl.cdiv(B, tb)

    x2d = x.astype(jnp.float32).reshape(B, 1)
    # Pre-scale W by 4 once in the wrapper (angle expressed in quarter-periods
    # inside the kernel); the 2*pi multiply on the (TB, H) path is gone.
    w4 = (W.astype(jnp.float32) * 4.0).reshape(1, H)

    kernel = functools.partial(_gfp_kernel, half_dim=H)

    out = pl.pallas_call(
        kernel,
        out_shape=jax.ShapeDtypeStruct((B, embed_dim), out_dtype),
        grid_spec=pltpu.PrefetchScalarGridSpec(
            num_scalar_prefetch=0,
            grid=(grid_b,),
            in_specs=[
                pl.BlockSpec((tb, 1), lambda i: (i, 0)),   # batch tile of timesteps
                pl.BlockSpec((1, H), lambda i: (0, 0)),    # 4*W stays VMEM-resident
            ],
            # Partial final block (B % tb != 0) is clipped by Pallas on
            # writeback -> no padding and no out[:B] slice needed.
            out_specs=pl.BlockSpec((tb, embed_dim), lambda i: (i, 0)),
        ),
        compiler_params=pltpu.CompilerParams(
            # Batch tiles are independent -> shardable across both TCs on v7x;
            # neutral on single-TC v5e/v6e.
            dimension_semantics=("parallel",),
        ),
    )(x2d, w4)

    return out


if __name__ == "__main__":
    # Small shapes consistent with the module: batch of timesteps, embed_dim.
    B = 8
    embed_dim = 256            # half = 128 -> lane-aligned halves
    scale = 30.0

    key = jax.random.PRNGKey(0)
    kx, kw = jax.random.split(key)

    # Deterministic parameter init (matches torch.randn(embed_dim//2) * scale).
    W = jax.random.normal(kw, (embed_dim // 2,), dtype=jnp.float32) * scale
    # Example timesteps.
    x = jax.random.uniform(kx, (B,), dtype=jnp.float32)

    out = gaussian_fourier_projection(x, W)
    out = jax.block_until_ready(out)
    assert out.shape == (B, embed_dim)

    # Reference in float64 (host numpy). The kernel's shared range reduction is
    # at least as accurate as the module's naive f32 sin(x*W*2*pi); the f32
    # rounding of the large phase (|x*W| up to ~1e2) bounds the difference at
    # ~1e-4, hence the tolerance below.
    x64 = np.asarray(x, dtype=np.float64)
    W64 = np.asarray(W, dtype=np.float64)
    xp = x64[:, None] * W64[None, :] * 2.0 * np.pi
    ref = np.concatenate([np.sin(xp), np.cos(xp)], axis=-1)
    assert np.allclose(np.asarray(out, dtype=np.float64), ref, atol=3e-4, rtol=0.0)

    print("KERNEL_OK")
</pallas_src>

<mosaic_0001>
module attributes {stable_mosaic.version = 11 : i64} {
  func.func @_gfp_kernel(%arg0: i32, %arg1: memref<8x1xf32, #tpu.memory_space<vmem>>, %arg2: memref<1x128xf32, #tpu.memory_space<vmem>>, %arg3: memref<8x256xf32, #tpu.memory_space<vmem>>) attributes {dimension_semantics = [#tpu.dimension_semantics<parallel>], iteration_bounds = array<i64: 1>, scalar_prefetch = 0 : i64, scratch_operands = 0 : i64, tpu.core_type = #tpu.core_type<tc>, window_params = [{transform_indices = @transform_0, window_bounds = array<i64: 8, 1>}, {pipeline_mode = #tpu.pipeline_mode<synchronous>, transform_indices = @transform_1, window_bounds = array<i64: 1, 128>}, {transform_indices = @transform_2, window_bounds = array<i64: 8, 256>}]} {
    %c0 = arith.constant 0 : index
    %c0_0 = arith.constant 0 : index
    %0 = vector.load %arg1[%c0, %c0_0] : memref<8x1xf32, #tpu.memory_space<vmem>>, vector<8x1xf32>
    %c0_1 = arith.constant 0 : index
    %c0_2 = arith.constant 0 : index
    %1 = vector.load %arg2[%c0_1, %c0_2] : memref<1x128xf32, #tpu.memory_space<vmem>>, vector<1x128xf32>
    %2 = vector.broadcast %0 : vector<8x1xf32> to vector<8x128xf32>
    %3 = vector.broadcast %1 : vector<1x128xf32> to vector<8x128xf32>
    %4 = arith.mulf %2, %3 : vector<8x128xf32>
    %cst = arith.constant 5.000000e-01 : f32
    %5 = vector.broadcast %cst : f32 to vector<8x128xf32>
    %6 = arith.addf %4, %5 : vector<8x128xf32>
    %7 = math.floor %6 : vector<8x128xf32>
    %8 = arith.subf %4, %7 : vector<8x128xf32>
    %cst_3 = arith.constant 1.57079637 : f32
    %9 = vector.broadcast %cst_3 : f32 to vector<8x128xf32>
    %10 = arith.mulf %8, %9 : vector<8x128xf32>
    %11 = arith.mulf %10, %10 : vector<8x128xf32>
    %cst_4 = arith.constant 2.71831141E-6 : f32
    %12 = vector.broadcast %cst_4 : f32 to vector<8x128xf32>
    %13 = arith.mulf %11, %12 : vector<8x128xf32>
    %cst_5 = arith.constant -1.98393347E-4 : f32
    %14 = vector.broadcast %cst_5 : f32 to vector<8x128xf32>
    %15 = arith.addf %14, %13 : vector<8x128xf32>
    %16 = arith.mulf %11, %15 : vector<8x128xf32>
    %cst_6 = arith.constant 0.00833332911 : f32
    %17 = vector.broadcast %cst_6 : f32 to vector<8x128xf32>
    %18 = arith.addf %17, %16 : vector<8x128xf32>
    %19 = arith.mulf %11, %18 : vector<8x128xf32>
    %cst_7 = arith.constant -0.166666672 : f32
    %20 = vector.broadcast %cst_7 : f32 to vector<8x128xf32>
    %21 = arith.addf %20, %19 : vector<8x128xf32>
    %22 = arith.mulf %11, %21 : vector<8x128xf32>
    %cst_8 = arith.constant 1.000000e+00 : f32
    %23 = vector.broadcast %cst_8 : f32 to vector<8x128xf32>
    %24 = arith.addf %23, %22 : vector<8x128xf32>
    %25 = arith.mulf %10, %24 : vector<8x128xf32>
    %cst_9 = arith.constant 2.43904487E-5 : f32
    %26 = vector.broadcast %cst_9 : f32 to vector<8x128xf32>
    %27 = arith.mulf %11, %26 : vector<8x128xf32>
    %cst_10 = arith.constant -0.00138867635 : f32
    %28 = vector.broadcast %cst_10 : f32 to vector<8x128xf32>
    %29 = arith.addf %28, %27 : vector<8x128xf32>
    %30 = arith.mulf %11, %29 : vector<8x128xf32>
    %cst_11 = arith.constant 0.0416666232 : f32
    %31 = vector.broadcast %cst_11 : f32 to vector<8x128xf32>
    %32 = arith.addf %31, %30 : vector<8x128xf32>
    %33 = arith.mulf %11, %32 : vector<8x128xf32>
    %cst_12 = arith.constant -5.000000e-01 : f32
    %34 = vector.broadcast %cst_12 : f32 to vector<8x128xf32>
    %35 = arith.addf %34, %33 : vector<8x128xf32>
    %36 = arith.mulf %11, %35 : vector<8x128xf32>
    %cst_13 = arith.constant 1.000000e+00 : f32
    %37 = vector.broadcast %cst_13 : f32 to vector<8x128xf32>
    %38 = arith.addf %37, %36 : vector<8x128xf32>
    %39 = arith.fptosi %7 : vector<8x128xf32> to vector<8x128xi32>
    %c3_i32 = arith.constant 3 : i32
    %40 = vector.broadcast %c3_i32 : i32 to vector<8x128xi32>
    %41 = arith.andi %39, %40 : vector<8x128xi32>
    %c1_i32 = arith.constant 1 : i32
    %42 = vector.broadcast %c1_i32 : i32 to vector<8x128xi32>
    %43 = arith.andi %41, %42 : vector<8x128xi32>
    %c1_i32_14 = arith.constant 1 : i32
    %44 = vector.broadcast %c1_i32_14 : i32 to vector<8x128xi32>
    %45 = arith.cmpi eq, %43, %44 : vector<8x128xi32>
    %46 = arith.select %45, %38, %25 : vector<8x128xi1>, vector<8x128xf32>
    %47 = arith.select %45, %25, %38 : vector<8x128xi1>, vector<8x128xf32>
    %c2_i32 = arith.constant 2 : i32
    %48 = vector.broadcast %c2_i32 : i32 to vector<8x128xi32>
    %49 = arith.cmpi sge, %41, %48 : vector<8x128xi32>
    %cst_15 = arith.constant 0.000000e+00 : f32
    %50 = vector.broadcast %cst_15 : f32 to vector<8x128xf32>
    %51 = arith.subf %50, %46 : vector<8x128xf32>
    %52 = arith.select %49, %51, %46 : vector<8x128xi1>, vector<8x128xf32>
    %c1_i32_16 = arith.constant 1 : i32
    %53 = vector.broadcast %c1_i32_16 : i32 to vector<8x128xi32>
    %54 = arith.cmpi eq, %41, %53 : vector<8x128xi32>
    %c2_i32_17 = arith.constant 2 : i32
    %55 = vector.broadcast %c2_i32_17 : i32 to vector<8x128xi32>
    %56 = arith.cmpi eq, %41, %55 : vector<8x128xi32>
    %57 = arith.ori %54, %56 : vector<8x128xi1>
    %cst_18 = arith.constant 0.000000e+00 : f32
    %58 = vector.broadcast %cst_18 : f32 to vector<8x128xf32>
    %59 = arith.subf %58, %47 : vector<8x128xf32>
    %60 = arith.select %57, %59, %47 : vector<8x128xi1>, vector<8x128xf32>
    %c0_19 = arith.constant 0 : index
    %c0_20 = arith.constant 0 : index
    %61 = vector.load %arg3[%c0_19, %c0_20] : memref<8x256xf32, #tpu.memory_space<vmem>>, vector<8x128xf32>
    tpu.vector_store %arg3[%c0_19, %c0_20], %52 {strides = array<i32>} : memref<8x256xf32, #tpu.memory_space<vmem>>, vector<8x128xf32>,
    %c0_21 = arith.constant 0 : index
    %c128 = arith.constant 128 : index
    %62 = vector.load %arg3[%c0_21, %c128] : memref<8x256xf32, #tpu.memory_space<vmem>>, vector<8x128xf32>
    tpu.vector_store %arg3[%c0_21, %c128], %60 {strides = array<i32>} : memref<8x256xf32, #tpu.memory_space<vmem>>, vector<8x128xf32>,
    return
  }
  func.func @transform_0(%arg0: i32) -> (i32, i32) {
    %c0_i32 = arith.constant 0 : i32
    %c0_i32_0 = arith.constant 0 : i32
    return %arg0, %c0_i32 : i32, i32
  }
  func.func @transform_1(%arg0: i32) -> (i32, i32) {
    %c0_i32 = arith.constant 0 : i32
    %c0_i32_0 = arith.constant 0 : i32
    %c0_i32_1 = arith.constant 0 : i32
    return %c0_i32, %c0_i32_0 : i32, i32
  }
  func.func @transform_2(%arg0: i32) -> (i32, i32) {
    %c0_i32 = arith.constant 0 : i32
    %c0_i32_0 = arith.constant 0 : i32
    return %arg0, %c0_i32 : i32, i32
  }
}

</mosaic_0001>

<llo_original>
// kernel: tpu_custom_call.1
$region0: #{tpu_custom_call.1}
  #allocation0 [shape = 'u32[]', space=smem, size = 0x4, offset = 0x4, fixed_abs, tag = 'smem constant byte address 0x4 - core index']
  #allocation1 [shape = 'u32[144,128]{1,0:T(1,128)}', space=vmem, size = 0x12000, scoped, tag = 'internal scratch']
  %s0 = inlined_call_operand.vmem [shape: f32[8,1], index: 0, kind: input, shape index: {}]
  %s1 = inlined_call_operand.vmem [shape: f32[1,128], index: 1, kind: input, shape index: {}]
  %s2 = inlined_call_operand.hbm [shape: f32[8,256], index: 2, kind: output, shape index: {}]
  %s3 = sld [smem:[#allocation0]]
  $region18: #{tpu_custom_call.1} parent=0
    _
  %s5 = ssub.s32 1, %s3
  %s6 = scalar_select 0, %s5, %s3
  $region1: #{tpu_custom_call.1} parent=0
    #allocation2 [shape = 'u8[8192]{0}', space=vmem, size = 0x2000, scoped, tag = 'output window, operand 0, single buffered']
    #allocation3 [shape = 's32[1]{0}', space=sflag, size = 0x4, scoped, tag = 'scoped memory for tpu_custom_call.1']
    %7 = vsyncpa [#allocation3], 0
    // Predicated region
    $region2: #{tpu_custom_call.1} parent=1 // pred_check
      _
    $region3: #{tpu_custom_call.1} parent=1 // pred_check_branch
      %9 = sbr.rel (0) target = $region5
    $region4: #{tpu_custom_call.1} parent=1 // pred_region
      _
    $region5: #{tpu_custom_call.1} parent=1 // pred_fallthru
      _
    // Predicated region
    $region6: #{tpu_custom_call.1} parent=1 // pred_check
      _
    $region7: #{tpu_custom_call.1} parent=1 // pred_check_branch
      %11 = sbr.rel (0) target = $region9
    $region8: #{tpu_custom_call.1} parent=1 // pred_region
      _
    $region9: #{tpu_custom_call.1} parent=1 // pred_fallthru
      _
    %v12 = vld [vmem:[%s0] sm:$0xff]
    %v13 = vld [vmem:[%s1] sm:$0x1]
    %15 = vset.pattern.permute.xlu0 0
    %16 = vperm.xlu0 %15, %v12
    %v17 = vpop.permute.xlu0 %16
    %v20 = vlaneseq
    %v21 = vshrl.u32 %v20, 7
    %v22 = vsub.s32 0, %v21
    %v23 = vrot.slane %v13, %v22
    %v25 = vmul.f32 %v17, %v23
    %v26 = vadd.f32 %v25, 0.5
    %v27 = vfloor.f32 %v26
    %v28 = vsub.f32 %v25, %v27
    %v29 = vmul.f32 %v28, 1.5707964
    %v30 = vmul.f32 %v29, %v29
    %v31 = vmul.f32 %v30, 2.7183114e-06
    %v32 = vadd.f32 %v31, -0.00019839335
    %v33 = vmul.f32 %v30, %v32
    %v34 = vadd.f32 %v33, 0.008333329
    %v35 = vmul.f32 %v30, %v34
    %v36 = vadd.f32 %v35, -0.16666667
    %v37 = vmul.f32 %v30, %v36
    %v38 = vadd.f32 %v37, 1.0
    %v39 = vmul.f32 %v29, %v38
    %v40 = vmul.f32 %v30, 2.4390449e-05
    %v41 = vadd.f32 %v40, -0.0013886763
    %v42 = vmul.f32 %v30, %v41
    %v43 = vadd.f32 %v42, 0.041666623
    %v44 = vmul.f32 %v30, %v43
    %v45 = vadd.f32 %v44, -0.5
    %v46 = vmul.f32 %v30, %v45
    %v47 = vadd.f32 %v46, 1.0
    %v48 = vcvt.f32.s32.to.zero.pseudo %v27
    %v49 = vand.u32 %v48, 3
    %v50 = vand.u32 %v49, 1
    %vm51 = vcmp.eq.s32.totalorder %v50, 1
    %v52 = vsel %vm51, %v47, %v39
    %v53 = vsel %vm51, %v39, %v47
    %vm54 = vcmp.ge.s32.totalorder %v49, 2
    %v55 = vsub.f32 0.0, %v52
    %v56 = vsel %vm54, %v55, %v52
    %vm57 = vcmp.eq.s32.totalorder %v49, 1
    %vm58 = vcmp.eq.s32.totalorder %v49, 2
    %vm59 = vmor %vm57, %vm58
    %v60 = vsub.f32 0.0, %v53
    %v61 = vsel %vm59, %v60, %v53
    %62 = vst [vmem:[#allocation2] sm:$0xff] %v56
    %63 = vst [vmem:[#allocation2 + $0x8] sm:$0xff] %v61
    // Predicated region
    $region10: #{tpu_custom_call.1} parent=1 // pred_check
      _
    $region11: #{tpu_custom_call.1} parent=1 // pred_check_branch
      %65 = sbr.rel (0) target = $region13
    $region12: #{tpu_custom_call.1} parent=1 // pred_region
      %s67 = ssub.s32 256, 256
      %68 = vsyncadd [#allocation3], %s67
      %s70 = sshll.u32 [#allocation2], 4
      %s71 = int_to_ptr.vmem [resolvable:$true] %s70
      %73 = dma.vmem_to_hbm [thread:$0]  %s71, 256, %s2, [#allocation3]
    $region13: #{tpu_custom_call.1} parent=1 // pred_fallthru
      _
    // Predicated region
    $region14: #{tpu_custom_call.1} parent=1 // pred_check
      _
    $region15: #{tpu_custom_call.1} parent=1 // pred_check_branch
      %75 = sbr.rel (0) target = $region17
    $region16: #{tpu_custom_call.1} parent=1 // pred_region
      %76 = dma.done [#allocation3], 256
    $region17: #{tpu_custom_call.1} parent=1 // pred_fallthru
      _
    %77 = vsyncpa [#allocation3], 1

</llo_original>
